<compile_context>
chip_gen: v7x
topology: tpu7x:2x2x1
jax: 0.10.0
libtpu: 0.0.40
codegen_flags: <defaults>
</compile_context>

<pallas_src>
import functools
import math

import jax
import jax.numpy as jnp
from jax import lax
from jax.experimental import pallas as pl
from jax.experimental.pallas import tpu as pltpu


def _round_up(x, m):
    return (x + m - 1) // m * m


def _vmem_capacity_bytes():
    """Per-core VMEM capacity; conservative 64 MiB (v7x) fallback if the query fails."""
    try:
        cap = getattr(pltpu.get_tpu_info(), "vmem_capacity_bytes", None)
        if cap:
            return int(cap)
    except Exception:
        pass
    return 64 * 1024 * 1024


def _biaffine_kernel(head_ref, dep_ref, u_wide_ref, u_db_ref, u_cc_ref, out_ref,
                     *, precision):
    """One (batch, q-tile) grid point.

    head_ref  : (1, TQ, INp)         q-tile of head rows (feature axis zero-padded)
    dep_ref   : (1, Sp, INp)         all dep rows for this batch element (padded)
    u_wide_ref: (INp, O*INp + HBW)   [U[:, :in, :in] blocks | U[:, :in, in] cols]  (resident)
    u_db_ref  : (O, INp)             U[:, in, :in]  dep-bias rows                  (resident)
    u_cc_ref  : (O, 1)               U[:, in, in]   constant term, f32             (resident)
    out_ref   : (1, TQ, O*Sp)        lane-dense slab, out[x, o*Sp + y] = score[o, x, y]
    """
    h = head_ref[0]                       # (TQ, INp)
    d = dep_ref[0]                        # (Sp, INp)
    in_pad = h.shape[1]
    s_pad = d.shape[0]
    o_dim = u_db_ref.shape[0]
    mm_dtype = h.dtype                    # f32 or bf16, chosen by the wrapper

    # One wide MXU matmul fused over all output channels AND the head-bias
    # columns (f32 accumulation):
    #   tmp_full[x, o*INp + j] = sum_i h[x, i] * U[o, i, j]
    #   tmp_full[x, O*INp + o] = sum_i h[x, i] * U[o, i, in_dim]   (= head bias hb)
    tmp_full = jnp.dot(h, u_wide_ref[...], preferred_element_type=jnp.float32,
                       precision=precision)                        # (TQ, O*INp + HBW)
    hb = tmp_full[:, o_dim * in_pad:o_dim * in_pad + o_dim]        # (TQ, O)  f32
    # Cast ONCE (not per-o): halves the live tmp footprint in the bf16 path.
    tmp = tmp_full[:, :o_dim * in_pad].astype(mm_dtype)            # (TQ, O*INp)

    # dep-side bias + constant:  db[o, y] = sum_j U[o, in, j] * d[y, j] + U[o, in, in]
    db = lax.dot_general(u_db_ref[...], d, (((1,), (1,)), ((), ())),
                         preferred_element_type=jnp.float32,
                         precision=precision)                      # (O, Sp)
    db = db + u_cc_ref[...]

    # Second contraction, unrolled over the (small, static) out_dim; every slice
    # below is a free view because INp and Sp are multiples of 128, and each
    # per-o store is an unmasked full-lane vst.
    # TODO(synk): for large out_dim, move O onto a grid axis instead of unrolling.
    for o in range(o_dim):
        tmp_o = tmp[:, o * in_pad:(o + 1) * in_pad]                # (TQ, INp) free view
        core = lax.dot_general(tmp_o, d, (((1,), (1,)), ((), ())),
                               preferred_element_type=jnp.float32,
                               precision=precision)                # (TQ, Sp)
        block = core + hb[:, o:o + 1] + db[o:o + 1, :]
        out_ref[0, :, o * s_pad:(o + 1) * s_pad] = block.astype(out_ref.dtype)


@functools.partial(jax.jit,
                   static_argnames=("compute_dtype", "out_dtype", "tile_q", "precision"))
def biaffine_attention(head, dep, U, *, compute_dtype=jnp.float32, out_dtype=None,
                       tile_q=None, precision=None):
    """head, dep: (B, S, in_dim);  U: (O, in_dim+1, in_dim+1)  ->  (B, O, S, S).

    compute_dtype: dtype fed to the MXU (bfloat16 recommended on v5e/v6e/v7x
        whenever accuracy permits: native MXU rate, half the DMA bytes).
    out_dtype:     dtype of the returned scores; defaults to compute_dtype so the
        bf16 path also halves output writeback (the dominant HBM traffic).
    precision:     forwarded to the matmuls; default MXU precision lowers f32 to
        bf16 passes -- pass lax.Precision.HIGHEST for true f32. bf16-compute
        error grows with in_dim (tmp is truncated before the second matmul).
    """
    B, S, in_dim = head.shape
    O, D, D2 = U.shape
    assert D == in_dim + 1 and D2 == in_dim + 1
    if out_dtype is None:
        out_dtype = compute_dtype

    itemsize = jnp.dtype(compute_dtype).itemsize
    out_itemsize = jnp.dtype(out_dtype).itemsize

    # ---- lane-aligned padded extents --------------------------------------
    in_pad = _round_up(in_dim, 128)   # contraction dim: lane-aligned per-o slices
    s_pad = _round_up(S, 128)         # dep/key axis: unmasked full-lane stores
    s_q = _round_up(S, 8)             # head/query axis: sublane granularity
    hb_w = _round_up(O, 128)          # head-bias column block appended to u_wide
    w = O * in_pad + hb_w

    # ---- VMEM-aware tiling / pipelining choices ----------------------------
    vmem_cap = _vmem_capacity_bytes()
    vmem_limit = min(vmem_cap * 3 // 4, 100 * 1024 * 1024)   # ~48 MiB v7x, ~96 MiB v5e/v6e
    dep_bufs = 1 if vmem_cap <= 96 * 1024 * 1024 else 2      # single-buffer dep on 64 MiB parts

    def vmem_estimate(tq):
        fp = 2 * tq * in_pad * itemsize                 # head tile (double-buffered)
        fp += dep_bufs * s_pad * in_pad * itemsize      # dep rows
        fp += in_pad * w * itemsize                     # u_wide (single-buffered, resident)
        fp += O * in_pad * itemsize + O * 4             # u_db, u_cc
        fp += 2 * tq * O * s_pad * out_itemsize         # output slab (double-buffered)
        fp += tq * w * 4                                # tmp_full (f32 accumulator)
        fp += tq * O * in_pad * itemsize                # tmp (compute dtype)
        fp += 2 * tq * s_pad * 4 + O * s_pad * 4        # per-o core / epilogue temporaries
        return fp

    if tile_q is None:
        candidates = [t for t in (1024, 512, 256, 128, 64, 32, 16, 8) if s_q % t == 0]
        if not candidates:
            candidates = [s_q]
        tile_q = candidates[-1]
        for t in candidates:                            # largest tile within the budget
            if vmem_estimate(t) <= int(vmem_limit * 0.85):
                tile_q = t
                break
    assert s_q % tile_q == 0
    n_q = s_q // tile_q
    # TODO(synk): for very large S on 64 MiB/TC parts, add a dep/key grid axis
    # ("arbitrary") so dep and the output slab tile too, instead of shrinking tile_q.

    # ---- parameter-sized, one-time operand prep (all zero-padded) -----------
    head_c = jnp.pad(head.astype(compute_dtype),
                     ((0, 0), (0, s_q - S), (0, in_pad - in_dim)))
    dep_c = jnp.pad(dep.astype(compute_dtype),
                    ((0, 0), (0, s_pad - S), (0, in_pad - in_dim)))

    u_core = jnp.pad(U[:, :in_dim, :in_dim],
                     ((0, 0), (0, in_pad - in_dim), (0, in_pad - in_dim)))      # (O, INp, INp)
    u_mat = u_core.transpose(1, 0, 2).reshape(in_pad, O * in_pad)               # (INp, O*INp)
    u_hb = jnp.pad(U[:, :in_dim, in_dim].T,
                   ((0, in_pad - in_dim), (0, hb_w - O)))                       # (INp, HBW)
    u_wide = jnp.concatenate([u_mat, u_hb], axis=1).astype(compute_dtype)       # (INp, W)
    u_db = jnp.pad(U[:, in_dim, :in_dim],
                   ((0, 0), (0, in_pad - in_dim))).astype(compute_dtype)        # (O, INp)
    u_cc = U[:, in_dim, in_dim].reshape(O, 1).astype(jnp.float32)               # (O, 1)

    flops = 2 * B * s_q * in_pad * w + 2 * B * O * in_pad * s_pad * (s_q + n_q)
    bytes_accessed = ((head_c.size + dep_c.size + u_wide.size + u_db.size) * itemsize
                      + u_cc.size * 4 + B * s_q * O * s_pad * out_itemsize)

    resident = dict(pipeline_mode=pl.Buffered(1))
    dep_kwargs = dict(pipeline_mode=pl.Buffered(1)) if dep_bufs == 1 else {}

    slab = pl.pallas_call(
        functools.partial(_biaffine_kernel, precision=precision),
        out_shape=jax.ShapeDtypeStruct((B, s_q, O * s_pad), out_dtype),
        grid_spec=pltpu.PrefetchScalarGridSpec(
            num_scalar_prefetch=0,
            grid=(B, n_q),
            in_specs=[
                pl.BlockSpec((1, tile_q, in_pad), lambda b, q: (b, q, 0)),      # head tile (streams)
                pl.BlockSpec((1, s_pad, in_pad), lambda b, q: (b, 0, 0),        # dep rows (per batch)
                             **dep_kwargs),
                pl.BlockSpec((in_pad, w), lambda b, q: (0, 0), **resident),     # U core + head-bias cols
                pl.BlockSpec((O, in_pad), lambda b, q: (0, 0), **resident),     # dep-bias rows
                pl.BlockSpec((O, 1), lambda b, q: (0, 0), **resident),          # constant term
            ],
            out_specs=pl.BlockSpec((1, tile_q, O * s_pad), lambda b, q: (b, q, 0)),
        ),
        compiler_params=pltpu.CompilerParams(
            dimension_semantics=("parallel", "parallel"),
            vmem_limit_bytes=vmem_limit,
        ),
        cost_estimate=pl.CostEstimate(flops=flops, transcendentals=0,
                                      bytes_accessed=bytes_accessed),
    )(head_c, dep_c, u_wide, u_db, u_cc)

    # Lane-dense slab (B, Sq, O*Sp) -> (B, O, S, S): layout plumbing outside the kernel.
    scores = slab.reshape(B, s_q, O, s_pad).transpose(0, 2, 1, 3)
    return scores[:, :, :S, :S]


def init_biaffine_U(key, in_dim, out_dim, dtype=jnp.float32):
    """Deterministic xavier_uniform init matching nn.init.xavier_uniform_ semantics."""
    D = in_dim + 1
    fan_in = D * D          # size(1) * receptive_field (dims 2:)
    fan_out = out_dim * D   # size(0) * receptive_field
    bound = math.sqrt(6.0 / (fan_in + fan_out))
    return jax.random.uniform(key, (out_dim, D, D), dtype=dtype,
                              minval=-bound, maxval=bound)


if __name__ == "__main__":
    batch, seq_len, in_dim, out_dim = 2, 8, 32, 4

    key = jax.random.PRNGKey(0)
    k_head, k_dep, k_u = jax.random.split(key, 3)
    head = jax.random.normal(k_head, (batch, seq_len, in_dim), dtype=jnp.float32)
    dep = jax.random.normal(k_dep, (batch, seq_len, in_dim), dtype=jnp.float32)
    U = init_biaffine_U(k_u, in_dim, out_dim)

    # Reference (plain JAX einsum, same semantics as the PyTorch forward).
    ones = jnp.ones((batch, seq_len, 1), dtype=head.dtype)
    ref = jnp.einsum("bxi,oij,byj->boxy",
                     jnp.concatenate([head, ones], axis=-1), U,
                     jnp.concatenate([dep, ones], axis=-1))

    # f32 compute path (f32 output).
    scores = biaffine_attention(head, dep, U)
    jax.block_until_ready(scores)
    assert scores.shape == (batch, out_dim, seq_len, seq_len)
    assert scores.dtype == jnp.float32
    assert jnp.allclose(scores, ref, atol=2e-4, rtol=2e-4)

    # bf16 compute path (f32 accumulation, bf16 output slab) -- looser tolerance.
    scores_bf16 = biaffine_attention(head, dep, U, compute_dtype=jnp.bfloat16)
    jax.block_until_ready(scores_bf16)
    assert scores_bf16.shape == (batch, out_dim, seq_len, seq_len)
    assert scores_bf16.dtype == jnp.bfloat16
    assert jnp.allclose(scores_bf16.astype(jnp.float32), ref, atol=2e-1, rtol=5e-2)

    print("KERNEL_OK")
</pallas_src>

<mosaic_0001>
module attributes {stable_mosaic.version = 11 : i64} {
  func.func @_biaffine_kernel(%arg0: i32, %arg1: i32, %arg2: memref<1x8x128xf32, #tpu.memory_space<vmem>>, %arg3: memref<1x128x128xf32, #tpu.memory_space<vmem>>, %arg4: memref<128x640xf32, #tpu.memory_space<vmem>>, %arg5: memref<4x128xf32, #tpu.memory_space<vmem>>, %arg6: memref<4x1xf32, #tpu.memory_space<vmem>>, %arg7: memref<1x8x512xf32, #tpu.memory_space<vmem>>) attributes {dimension_semantics = [#tpu.dimension_semantics<parallel>, #tpu.dimension_semantics<parallel>], iteration_bounds = array<i64: 2, 1>, scalar_prefetch = 0 : i64, scratch_operands = 0 : i64, tpu.core_type = #tpu.core_type<tc>, window_params = [{transform_indices = @transform_0, window_bounds = array<i64: 1, 8, 128>}, {pipeline_mode = #tpu.pipeline_mode<synchronous>, transform_indices = @transform_1, window_bounds = array<i64: 1, 128, 128>}, {pipeline_mode = #tpu.pipeline_mode<synchronous>, transform_indices = @transform_2, window_bounds = array<i64: 128, 640>}, {pipeline_mode = #tpu.pipeline_mode<synchronous>, transform_indices = @transform_3, window_bounds = array<i64: 4, 128>}, {pipeline_mode = #tpu.pipeline_mode<synchronous>, transform_indices = @transform_4, window_bounds = array<i64: 4, 1>}, {transform_indices = @transform_5, window_bounds = array<i64: 1, 8, 512>}]} {
    %c0 = arith.constant 0 : index
    %c0_0 = arith.constant 0 : index
    %c0_1 = arith.constant 0 : index
    %0 = vector.load %arg2[%c0, %c0_0, %c0_1] : memref<1x8x128xf32, #tpu.memory_space<vmem>>, vector<1x8x128xf32>
    %1 = vector.shape_cast %0 : vector<1x8x128xf32> to vector<8x128xf32>
    %c0_2 = arith.constant 0 : index
    %c0_3 = arith.constant 0 : index
    %c0_4 = arith.constant 0 : index
    %2 = vector.load %arg3[%c0_2, %c0_3, %c0_4] : memref<1x128x128xf32, #tpu.memory_space<vmem>>, vector<1x128x128xf32>
    %3 = vector.shape_cast %2 : vector<1x128x128xf32> to vector<128x128xf32>
    %c0_5 = arith.constant 0 : index
    %c0_6 = arith.constant 0 : index
    %4 = vector.load %arg4[%c0_5, %c0_6] : memref<128x640xf32, #tpu.memory_space<vmem>>, vector<128x640xf32>
    %cst = arith.constant dense<0.000000e+00> : vector<8x640xf32>
    %5 = tpu.matmul %1, %4, %cst {dimension_numbers = #tpu.dot_dimension_numbers<[1], [0], [0], [1], [0, 0, 1, 1], [], []>} : vector<8x128xf32>, vector<128x640xf32>, vector<8x640xf32> -> vector<8x640xf32>
    %6 = vector.extract_strided_slice %5 {offsets = [0, 512], sizes = [8, 4], strides = [1, 1]} : vector<8x640xf32> to vector<8x4xf32>
    %7 = vector.extract_strided_slice %5 {offsets = [0, 0], sizes = [8, 512], strides = [1, 1]} : vector<8x640xf32> to vector<8x512xf32>
    %c0_7 = arith.constant 0 : index
    %c0_8 = arith.constant 0 : index
    %8 = vector.load %arg5[%c0_7, %c0_8] : memref<4x128xf32, #tpu.memory_space<vmem>>, vector<4x128xf32>
    %cst_9 = arith.constant dense<0.000000e+00> : vector<4x128xf32>
    %9 = tpu.matmul %8, %3, %cst_9 {dimension_numbers = #tpu.dot_dimension_numbers<[1], [1], [0], [0], [0, 0, 1, 0], [], []>} : vector<4x128xf32>, vector<128x128xf32>, vector<4x128xf32> -> vector<4x128xf32>
    %c0_10 = arith.constant 0 : index
    %c0_11 = arith.constant 0 : index
    %10 = vector.load %arg6[%c0_10, %c0_11] : memref<4x1xf32, #tpu.memory_space<vmem>>, vector<4x1xf32>
    %11 = vector.broadcast %10 : vector<4x1xf32> to vector<4x128xf32>
    %12 = arith.addf %9, %11 : vector<4x128xf32>
    %13 = vector.extract_strided_slice %7 {offsets = [0, 0], sizes = [8, 128], strides = [1, 1]} : vector<8x512xf32> to vector<8x128xf32>
    %cst_12 = arith.constant dense<0.000000e+00> : vector<8x128xf32>
    %14 = tpu.matmul %13, %3, %cst_12 {dimension_numbers = #tpu.dot_dimension_numbers<[1], [1], [0], [0], [0, 0, 1, 0], [], []>} : vector<8x128xf32>, vector<128x128xf32>, vector<8x128xf32> -> vector<8x128xf32>
    %15 = vector.extract_strided_slice %6 {offsets = [0, 0], sizes = [8, 1], strides = [1, 1]} : vector<8x4xf32> to vector<8x1xf32>
    %16 = vector.broadcast %15 : vector<8x1xf32> to vector<8x128xf32>
    %17 = arith.addf %14, %16 : vector<8x128xf32>
    %18 = vector.extract_strided_slice %12 {offsets = [0, 0], sizes = [1, 128], strides = [1, 1]} : vector<4x128xf32> to vector<1x128xf32>
    %19 = vector.broadcast %18 : vector<1x128xf32> to vector<8x128xf32>
    %20 = arith.addf %17, %19 : vector<8x128xf32>
    %c0_13 = arith.constant 0 : index
    %c0_14 = arith.constant 0 : index
    %c0_15 = arith.constant 0 : index
    %21 = vector.load %arg7[%c0_13, %c0_14, %c0_15] : memref<1x8x512xf32, #tpu.memory_space<vmem>>, vector<1x8x128xf32>
    %22 = vector.shape_cast %21 : vector<1x8x128xf32> to vector<8x128xf32>
    %23 = vector.shape_cast %20 : vector<8x128xf32> to vector<1x8x128xf32>
    tpu.vector_store %arg7[%c0_13, %c0_14, %c0_15], %23 {strides = array<i32>} : memref<1x8x512xf32, #tpu.memory_space<vmem>>, vector<1x8x128xf32>,
    %24 = vector.extract_strided_slice %7 {offsets = [0, 128], sizes = [8, 128], strides = [1, 1]} : vector<8x512xf32> to vector<8x128xf32>
    %cst_16 = arith.constant dense<0.000000e+00> : vector<8x128xf32>
    %25 = tpu.matmul %24, %3, %cst_16 {dimension_numbers = #tpu.dot_dimension_numbers<[1], [1], [0], [0], [0, 0, 1, 0], [], []>} : vector<8x128xf32>, vector<128x128xf32>, vector<8x128xf32> -> vector<8x128xf32>
    %26 = vector.extract_strided_slice %6 {offsets = [0, 1], sizes = [8, 1], strides = [1, 1]} : vector<8x4xf32> to vector<8x1xf32>
    %27 = vector.broadcast %26 : vector<8x1xf32> to vector<8x128xf32>
    %28 = arith.addf %25, %27 : vector<8x128xf32>
    %29 = vector.extract_strided_slice %12 {offsets = [1, 0], sizes = [1, 128], strides = [1, 1]} : vector<4x128xf32> to vector<1x128xf32>
    %30 = vector.broadcast %29 : vector<1x128xf32> to vector<8x128xf32>
    %31 = arith.addf %28, %30 : vector<8x128xf32>
    %c0_17 = arith.constant 0 : index
    %c0_18 = arith.constant 0 : index
    %c128 = arith.constant 128 : index
    %32 = vector.load %arg7[%c0_17, %c0_18, %c128] : memref<1x8x512xf32, #tpu.memory_space<vmem>>, vector<1x8x128xf32>
    %33 = vector.shape_cast %32 : vector<1x8x128xf32> to vector<8x128xf32>
    %34 = vector.shape_cast %31 : vector<8x128xf32> to vector<1x8x128xf32>
    tpu.vector_store %arg7[%c0_17, %c0_18, %c128], %34 {strides = array<i32>} : memref<1x8x512xf32, #tpu.memory_space<vmem>>, vector<1x8x128xf32>,
    %35 = vector.extract_strided_slice %7 {offsets = [0, 256], sizes = [8, 128], strides = [1, 1]} : vector<8x512xf32> to vector<8x128xf32>
    %cst_19 = arith.constant dense<0.000000e+00> : vector<8x128xf32>
    %36 = tpu.matmul %35, %3, %cst_19 {dimension_numbers = #tpu.dot_dimension_numbers<[1], [1], [0], [0], [0, 0, 1, 0], [], []>} : vector<8x128xf32>, vector<128x128xf32>, vector<8x128xf32> -> vector<8x128xf32>
    %37 = vector.extract_strided_slice %6 {offsets = [0, 2], sizes = [8, 1], strides = [1, 1]} : vector<8x4xf32> to vector<8x1xf32>
    %38 = vector.broadcast %37 : vector<8x1xf32> to vector<8x128xf32>
    %39 = arith.addf %36, %38 : vector<8x128xf32>
    %40 = vector.extract_strided_slice %12 {offsets = [2, 0], sizes = [1, 128], strides = [1, 1]} : vector<4x128xf32> to vector<1x128xf32>
    %41 = vector.broadcast %40 : vector<1x128xf32> to vector<8x128xf32>
    %42 = arith.addf %39, %41 : vector<8x128xf32>
    %c0_20 = arith.constant 0 : index
    %c0_21 = arith.constant 0 : index
    %c256 = arith.constant 256 : index
    %43 = vector.load %arg7[%c0_20, %c0_21, %c256] : memref<1x8x512xf32, #tpu.memory_space<vmem>>, vector<1x8x128xf32>
    %44 = vector.shape_cast %43 : vector<1x8x128xf32> to vector<8x128xf32>
    %45 = vector.shape_cast %42 : vector<8x128xf32> to vector<1x8x128xf32>
    tpu.vector_store %arg7[%c0_20, %c0_21, %c256], %45 {strides = array<i32>} : memref<1x8x512xf32, #tpu.memory_space<vmem>>, vector<1x8x128xf32>,
    %46 = vector.extract_strided_slice %7 {offsets = [0, 384], sizes = [8, 128], strides = [1, 1]} : vector<8x512xf32> to vector<8x128xf32>
    %cst_22 = arith.constant dense<0.000000e+00> : vector<8x128xf32>
    %47 = tpu.matmul %46, %3, %cst_22 {dimension_numbers = #tpu.dot_dimension_numbers<[1], [1], [0], [0], [0, 0, 1, 0], [], []>} : vector<8x128xf32>, vector<128x128xf32>, vector<8x128xf32> -> vector<8x128xf32>
    %48 = vector.extract_strided_slice %6 {offsets = [0, 3], sizes = [8, 1], strides = [1, 1]} : vector<8x4xf32> to vector<8x1xf32>
    %49 = vector.broadcast %48 : vector<8x1xf32> to vector<8x128xf32>
    %50 = arith.addf %47, %49 : vector<8x128xf32>
    %51 = vector.extract_strided_slice %12 {offsets = [3, 0], sizes = [1, 128], strides = [1, 1]} : vector<4x128xf32> to vector<1x128xf32>
    %52 = vector.broadcast %51 : vector<1x128xf32> to vector<8x128xf32>
    %53 = arith.addf %50, %52 : vector<8x128xf32>
    %c0_23 = arith.constant 0 : index
    %c0_24 = arith.constant 0 : index
    %c384 = arith.constant 384 : index
    %54 = vector.load %arg7[%c0_23, %c0_24, %c384] : memref<1x8x512xf32, #tpu.memory_space<vmem>>, vector<1x8x128xf32>
    %55 = vector.shape_cast %54 : vector<1x8x128xf32> to vector<8x128xf32>
    %56 = vector.shape_cast %53 : vector<8x128xf32> to vector<1x8x128xf32>
    tpu.vector_store %arg7[%c0_23, %c0_24, %c384], %56 {strides = array<i32>} : memref<1x8x512xf32, #tpu.memory_space<vmem>>, vector<1x8x128xf32>,
    return
  }
  func.func @transform_0(%arg0: i32, %arg1: i32) -> (i32, i32, i32) {
    %c0_i32 = arith.constant 0 : i32
    %c0_i32_0 = arith.constant 0 : i32
    return %arg0, %arg1, %c0_i32 : i32, i32, i32
  }
  func.func @transform_1(%arg0: i32, %arg1: i32) -> (i32, i32, i32) {
    %c0_i32 = arith.constant 0 : i32
    %c0_i32_0 = arith.constant 0 : i32
    %c0_i32_1 = arith.constant 0 : i32
    return %arg0, %c0_i32, %c0_i32_0 : i32, i32, i32
  }
  func.func @transform_2(%arg0: i32, %arg1: i32) -> (i32, i32) {
    %c0_i32 = arith.constant 0 : i32
    %c0_i32_0 = arith.constant 0 : i32
    %c0_i32_1 = arith.constant 0 : i32
    return %c0_i32, %c0_i32_0 : i32, i32
  }
  func.func @transform_3(%arg0: i32, %arg1: i32) -> (i32, i32) {
    %c0_i32 = arith.constant 0 : i32
    %c0_i32_0 = arith.constant 0 : i32
    %c0_i32_1 = arith.constant 0 : i32
    return %c0_i32, %c0_i32_0 : i32, i32
  }
  func.func @transform_4(%arg0: i32, %arg1: i32) -> (i32, i32) {
    %c0_i32 = arith.constant 0 : i32
    %c0_i32_0 = arith.constant 0 : i32
    %c0_i32_1 = arith.constant 0 : i32
    return %c0_i32, %c0_i32_0 : i32, i32
  }
  func.func @transform_5(%arg0: i32, %arg1: i32) -> (i32, i32, i32) {
    %c0_i32 = arith.constant 0 : i32
    %c0_i32_0 = arith.constant 0 : i32
    return %arg0, %arg1, %c0_i32 : i32, i32, i32
  }
}

</mosaic_0001>

<llo_original>
// kernel: biaffine_attention.1
$region0: #{biaffine_attention.1}
  #allocation0 [shape = 'u32[]', space=smem, size = 0x4, offset = 0x4, fixed_abs, tag = 'smem constant byte address 0x4 - core index']
  #allocation1 [shape = 'u32[144,128]{1,0:T(1,128)}', space=vmem, size = 0x12000, scoped, tag = 'internal scratch']
  %s0 = inlined_call_operand.vmem [shape: f32[2,8,128], index: 0, kind: input, shape index: {}]
  %s1 = inlined_call_operand.vmem [shape: f32[2,128,128], index: 1, kind: input, shape index: {}]
  %s2 = inlined_call_operand.vmem [shape: f32[128,640], index: 2, kind: input, shape index: {}]
  %s3 = inlined_call_operand.vmem [shape: f32[4,128], index: 3, kind: input, shape index: {}]
  %s4 = inlined_call_operand.vmem [shape: f32[4,1], index: 4, kind: input, shape index: {}]
  %s5 = inlined_call_operand.hbm [shape: f32[2,8,512], index: 5, kind: output, shape index: {}]
  %s6 = sld [smem:[#allocation0]]
  $region53: #{biaffine_attention.1} parent=0
    _
  %s8 = ssub.s32 1, %s6
  %s9 = scalar_select 0, %s8, %s6
  $region1: #{biaffine_attention.1} parent=0
    #allocation2 [shape = 'u8[32768]{0}', space=vmem, size = 0x8000, scoped, tag = 'output window, operand 0']
    #allocation3 [shape = 's32[2]{0}', space=sflag, size = 0x8, scoped, tag = 'scoped memory for biaffine_attention.1']
    %10 = vsyncpa [#allocation3], 0
    %s11 = scalar_lea.sflag [#allocation3], 1
    %12 = vsyncpa %s11, 0
    loop: start=0, step=1, limit=4
    $region2: #{biaffine_attention.1} parent=1 // loop_pre_header
      _
    $region3: #{biaffine_attention.1} parent=1 // loop_header
      %s14 = sphi 0, %s18
      %p15 = scmp.ge.s32.totalorder %s14, 4
      %s21 = sphi 0, %s33
      %s22 = sphi 0, %s29
      %s23 = sphi 0, %s21
      %s24 = sphi 0, %s22
      %s25 = sphi 0, %s23
      %s26 = sphi 0, %s24
      %s38 = sphi 0, %s40
      %s41 = sphi 0, %s38
      %s42 = sphi 0, %s41
      %s58 = sphi 0, %s42
      %s64 = sphi 0, %s66
      %s67 = sphi 0, %s64
      %s68 = sphi 0, %s67
      %s84 = sphi 0, %s68
      %s88 = sphi 0, %s88
      %s90 = sphi 0, %s88
      %s91 = sphi 0, %s90
      %s105 = sphi 0, %s91
      %s109 = sphi 0, %s109
      %s111 = sphi 0, %s109
      %s112 = sphi 0, %s111
      %s126 = sphi 0, %s112
      %s130 = sphi 0, %s130
      %s132 = sphi 0, %s130
      %s133 = sphi 0, %s132
      %s147 = sphi 0, %s133
      %s155 = sphi 0, %s157
      %s158 = sphi 0, %s155
      %s159 = sphi 0, %s158
      %s175 = sphi 0, %s159
    $region4: #{biaffine_attention.1} parent=1 // loop_header_branch
      %17 = sbr.rel (%p15) target = $region8
    $region5: #{biaffine_attention.1} parent=1 // loop_body
      %s19 = ssub.s32 %s14, 1
      %s20 = ssub.s32 %s14, 2
      %s27 = sadd.s32 1, %s22
      %p28 = scmp.ge.s32.totalorder %s27, 1
      %s29 = scalar_select %p28, 0, %s27
      %s30 = sadd.s32 1, %s21
      %s31 = scalar_select %p28, %s30, %s21
      %p32 = scmp.ge.s32.totalorder %s31, 2
      %s33 = scalar_select %p32, 0, %s31
      %s34 = ssub.s32 %s21, %s33
      %s35 = ssub.s32 %s22, %s29
      %s36 = sor.u32 %s34, %s35
      %p37 = scmp.eq.s32.totalorder %s36, 0
      %s39 = sadd.s32 %s38, 1
      %s40 = scalar_select %p37, %s38, %s39
      %p43 = pneg %p37
      %p44 = scmp.eq.s32.totalorder %s14, 1
      %p45 = por %p43, %p44
      %p46 = scmp.ne.s32.totalorder %s38, %s41
      %p47 = scmp.eq.s32.totalorder %s14, 0
      %p48 = por %p46, %p47
      %p49 = scmp.ne.s32.totalorder %s38, %s41
      %p50 = scmp.eq.s32.totalorder %s19, 1
      %p51 = por %p49, %p50
      %p52 = scmp.ne.s32.totalorder %s41, %s42
      %p53 = scmp.eq.s32.totalorder %s19, 0
      %p54 = por %p52, %p53
      %p55 = scmp.ne.s32.totalorder %s41, %s42
      %p56 = scmp.eq.s32.totalorder %s20, 1
      %p57 = por %p55, %p56
      %p59 = scmp.ne.s32.totalorder %s42, %s58
      %p60 = scmp.eq.s32.totalorder %s20, 0
      %p61 = por %p59, %p60
      %s62 = ssub.s32 %s21, %s33
      %p63 = scmp.eq.s32.totalorder %s62, 0
      %s65 = sadd.s32 %s64, 1
      %s66 = scalar_select %p63, %s64, %s65
      %p69 = pneg %p63
      %p70 = scmp.eq.s32.totalorder %s14, 1
      %p71 = por %p69, %p70
      %p72 = scmp.ne.s32.totalorder %s64, %s67
      %p73 = scmp.eq.s32.totalorder %s14, 0
      %p74 = por %p72, %p73
      %p75 = scmp.ne.s32.totalorder %s64, %s67
      %p76 = scmp.eq.s32.totalorder %s19, 1
      %p77 = por %p75, %p76
      %p78 = scmp.ne.s32.totalorder %s67, %s68
      %p79 = scmp.eq.s32.totalorder %s19, 0
      %p80 = por %p78, %p79
      %p81 = scmp.ne.s32.totalorder %s67, %s68
      %p82 = scmp.eq.s32.totalorder %s20, 1
      %p83 = por %p81, %p82
      %p85 = scmp.ne.s32.totalorder %s68, %s84
      %p86 = scmp.eq.s32.totalorder %s20, 0
      %p87 = por %p85, %p86
      %s89 = sadd.s32 %s88, 1
      %p92 = scmp.eq.s32.totalorder %s14, 1
      %p93 = scmp.ne.s32.totalorder %s88, %s90
      %p94 = scmp.eq.s32.totalorder %s14, 0
      %p95 = por %p93, %p94
      %p96 = scmp.ne.s32.totalorder %s88, %s90
      %p97 = scmp.eq.s32.totalorder %s19, 1
      %p98 = por %p96, %p97
      %p99 = scmp.ne.s32.totalorder %s90, %s91
      %p100 = scmp.eq.s32.totalorder %s19, 0
      %p101 = por %p99, %p100
      %p102 = scmp.ne.s32.totalorder %s90, %s91
      %p103 = scmp.eq.s32.totalorder %s20, 1
      %p104 = por %p102, %p103
      %p106 = scmp.ne.s32.totalorder %s91, %s105
      %p107 = scmp.eq.s32.totalorder %s20, 0
      %p108 = por %p106, %p107
      %s110 = sadd.s32 %s109, 1
      %p113 = scmp.eq.s32.totalorder %s14, 1
      %p114 = scmp.ne.s32.totalorder %s109, %s111
      %p115 = scmp.eq.s32.totalorder %s14, 0
      %p116 = por %p114, %p115
      %p117 = scmp.ne.s32.totalorder %s109, %s111
      %p118 = scmp.eq.s32.totalorder %s19, 1
      %p119 = por %p117, %p118
      %p120 = scmp.ne.s32.totalorder %s111, %s112
      %p121 = scmp.eq.s32.totalorder %s19, 0
      %p122 = por %p120, %p121
      %p123 = scmp.ne.s32.totalorder %s111, %s112
      %p124 = scmp.eq.s32.totalorder %s20, 1
      %p125 = por %p123, %p124
      %p127 = scmp.ne.s32.totalorder %s112, %s126
      %p128 = scmp.eq.s32.totalorder %s20, 0
      %p129 = por %p127, %p128
      %s131 = sadd.s32 %s130, 1
      %p134 = scmp.eq.s32.totalorder %s14, 1
      %p135 = scmp.ne.s32.totalorder %s130, %s132
      %p136 = scmp.eq.s32.totalorder %s14, 0
      %p137 = por %p135, %p136
      %p138 = scmp.ne.s32.totalorder %s130, %s132
      %p139 = scmp.eq.s32.totalorder %s19, 1
      %p140 = por %p138, %p139
      %p141 = scmp.ne.s32.totalorder %s132, %s133
      %p142 = scmp.eq.s32.totalorder %s19, 0
      %p143 = por %p141, %p142
      %p144 = scmp.ne.s32.totalorder %s132, %s133
      %p145 = scmp.eq.s32.totalorder %s20, 1
      %p146 = por %p144, %p145
      %p148 = scmp.ne.s32.totalorder %s133, %s147
      %p149 = scmp.eq.s32.totalorder %s20, 0
      %p150 = por %p148, %p149
      %s151 = ssub.s32 %s21, %s33
      %s152 = ssub.s32 %s22, %s29
      %s153 = sor.u32 %s151, %s152
      %p154 = scmp.eq.s32.totalorder %s153, 0
      %s156 = sadd.s32 %s155, 1
      %s157 = scalar_select %p154, %s155, %s156
      %p160 = pneg %p154
      %p161 = scmp.eq.s32.totalorder %s14, 1
      %p162 = por %p160, %p161
      %p163 = scmp.ne.s32.totalorder %s155, %s158
      %p164 = scmp.eq.s32.totalorder %s14, 0
      %p165 = por %p163, %p164
      %p166 = scmp.ne.s32.totalorder %s155, %s158
      %p167 = scmp.eq.s32.totalorder %s19, 1
      %p168 = por %p166, %p167
      %p169 = scmp.ne.s32.totalorder %s158, %s159
      %p170 = scmp.eq.s32.totalorder %s19, 0
      %p171 = por %p169, %p170
      %p172 = scmp.ne.s32.totalorder %s158, %s159
      %p173 = scmp.eq.s32.totalorder %s20, 1
      %p174 = por %p172, %p173
      %p176 = scmp.ne.s32.totalorder %s159, %s175
      %p177 = scmp.eq.s32.totalorder %s20, 0
      %p178 = por %p176, %p177
      %p179 = scmp.le.s32.totalorder 1, %s14
      %p180 = scmp.lt.s32.totalorder %s14, 3
      %p181 = pnand %p179, %p180
      %p182 = pneg %p181
      // Predicated region
      $region9: #{biaffine_attention.1} parent=5 // pred_check
        _
      $region10: #{biaffine_attention.1} parent=5 // pred_check_branch
        %184 = sbr.rel (%p181) target = $region12
      $region11: #{biaffine_attention.1} parent=5 // pred_region
        %s185 = ssub.s32 %s14, 1
        // Predicated region
        $region13: #{biaffine_attention.1} parent=11 // pred_check
          %p186 = pneg %p80
        $region14: #{biaffine_attention.1} parent=11 // pred_check_branch
          %188 = sbr.rel (%p186) target = $region16
        $region15: #{biaffine_attention.1} parent=11 // pred_region
          %p189 = scmp.lt.s32.totalorder %s23, 1
          %s190 = scalar_select %p189, %s23, 1
          %s191 = smul.addr %s190, 16
          %s192 = smul.addr %s191, 8
          %s193 = scalar_lea.vmem %s1, %s192
        $region16: #{biaffine_attention.1} parent=11 // pred_fallthru
          _
        // Predicated region
        $region17: #{biaffine_attention.1} parent=11 // pred_check
          %p194 = pneg %p101
        $region18: #{biaffine_attention.1} parent=11 // pred_check_branch
          %196 = sbr.rel (%p194) target = $region20
        $region19: #{biaffine_attention.1} parent=11 // pred_region
          _
        $region20: #{biaffine_attention.1} parent=11 // pred_fallthru
          _
        // Predicated region
        $region21: #{biaffine_attention.1} parent=11 // pred_check
          %p197 = pneg %p122
        $region22: #{biaffine_attention.1} parent=11 // pred_check_branch
          %199 = sbr.rel (%p197) target = $region24
        $region23: #{biaffine_attention.1} parent=11 // pred_region
          _
        $region24: #{biaffine_attention.1} parent=11 // pred_fallthru
          _
        // Predicated region
        $region25: #{biaffine_attention.1} parent=11 // pred_check
          %p200 = pneg %p143
        $region26: #{biaffine_attention.1} parent=11 // pred_check_branch
          %202 = sbr.rel (%p200) target = $region28
        $region27: #{biaffine_attention.1} parent=11 // pred_region
          _
        $region28: #{biaffine_attention.1} parent=11 // pred_fallthru
          _
      $region12: #{biaffine_attention.1} parent=5 // pred_fallthru
        _
      %p203 = scmp.lt.s32.totalorder %s14, 2
      // Predicated region
      $region29: #{biaffine_attention.1} parent=5 // pred_check
        %p204 = pneg %p203
      $region30: #{biaffine_attention.1} parent=5 // pred_check_branch
        %206 = sbr.rel (%p204) target = $region32
      $region31: #{biaffine_attention.1} parent=5 // pred_region
        // Predicated region
        $region33: #{biaffine_attention.1} parent=31 // pred_check
          %p207 = pneg %p48
        $region34: #{biaffine_attention.1} parent=31 // pred_check_branch
          %209 = sbr.rel (%p207) target = $region36
        $region35: #{biaffine_attention.1} parent=31 // pred_region
          %p210 = scmp.lt.s32.totalorder %s21, 1
          %s211 = scalar_select %p210, %s21, 1
          %p212 = scmp.lt.s32.totalorder %s22, 0
          %s213 = scalar_select %p212, %s22, 0
          %s214 = sadd.s32 %s213, %s211
          %s215 = smul.addr %s214, 8
          %s216 = scalar_lea.vmem %s0, %s215
        $region36: #{biaffine_attention.1} parent=31 // pred_fallthru
          _
      $region32: #{biaffine_attention.1} parent=5 // pred_fallthru
        _
      %p217 = scmp.le.s32.totalorder 1, %s14
      %p218 = scmp.lt.s32.totalorder %s14, 3
      %p219 = pnand %p217, %p218
      %p220 = pneg %p219
      // Predicated region
      $region37: #{biaffine_attention.1} parent=5 // pred_check
        _
      $region38: #{biaffine_attention.1} parent=5 // pred_check_branch
        %222 = sbr.rel (%p219) target = $region40
      $region39: #{biaffine_attention.1} parent=5 // pred_region
        %s223 = ssub.s32 %s14, 1
        %p224 = scmp.lt.s32.totalorder %s23, 1
        %s225 = scalar_select %p224, %s23, 1
        %p226 = scmp.lt.s32.totalorder %s24, 0
        %s227 = scalar_select %p226, %s24, 0
        %s228 = sadd.s32 %s227, %s225
        %s229 = smul.addr %s228, 8
        %s230 = scalar_lea.vmem %s0, %s229
        %p231 = pneg %p54
        %p232 = pneg %p51
        %p233 = scmp.lt.s32.totalorder %s23, 1
        %s234 = scalar_select %p233, %s23, 1
        %s235 = smul.addr %s234, 16
        %s236 = smul.addr %s235, 8
        %s237 = scalar_lea.vmem %s1, %s236
        %p238 = pneg %p80
        %p239 = pneg %p77
        %p240 = pneg %p101
        %p241 = pneg %p98
        %p242 = pneg %p122
        %p243 = pneg %p119
        %p244 = pneg %p143
        %p245 = pneg %p140
        %p246 = pneg %p171
        %p247 = pneg %p168
        %s248 = sand.u32 %s158, 1
        %s249 = scalar_lea.sflag [#allocation3], %s248
        %s250 = sand.u32 %s158, 1
        %s251 = smul.addr %s250, 32
        %s252 = scalar_lea.vmem [#allocation2], %s251
        %p253 = scmp.lt.s32.totalorder %s23, 1
        %s254 = scalar_select %p253, %s23, 1
        %p255 = scmp.lt.s32.totalorder %s24, 0
        %s256 = scalar_select %p255, %s24, 0
        %s257 = sadd.s32 %s256, %s254
        %s258 = smul.addr %s257, 8
        %s259 = scalar_lea.vmem %s0, %s258
        %p260 = scmp.lt.s32.totalorder %s23, 1
        %s261 = scalar_select %p260, %s23, 1
        %s262 = smul.addr %s261, 16
        %s263 = smul.addr %s262, 8
        %s264 = scalar_lea.vmem %s1, %s263
        %v265 = vld [vmem:[%s259] sm:$0xff]
        %v266 = vld [vmem:[%s264] sm:$0xff]
        %v267 = vld [vmem:[%s264 + $0x8] sm:$0xff]
        %v268 = vld [vmem:[%s264 + $0x10] sm:$0xff]
        %v269 = vld [vmem:[%s264 + $0x18] sm:$0xff]
        %v270 = vld [vmem:[%s264 + $0x20] sm:$0xff]
        %v271 = vld [vmem:[%s264 + $0x28] sm:$0xff]
        %v272 = vld [vmem:[%s264 + $0x30] sm:$0xff]
        %v273 = vld [vmem:[%s264 + $0x38] sm:$0xff]
        %v274 = vld [vmem:[%s264 + $0x40] sm:$0xff]
        %v275 = vld [vmem:[%s264 + $0x48] sm:$0xff]
        %v276 = vld [vmem:[%s264 + $0x50] sm:$0xff]
        %v277 = vld [vmem:[%s264 + $0x58] sm:$0xff]
        %v278 = vld [vmem:[%s264 + $0x60] sm:$0xff]
        %v279 = vld [vmem:[%s264 + $0x68] sm:$0xff]
        %v280 = vld [vmem:[%s264 + $0x70] sm:$0xff]
        %v281 = vld [vmem:[%s264 + $0x78] sm:$0xff]
        %v282 = vld [vmem:[%s2] sm:$0xff]
        %v283 = vld [vmem:[%s2 + $0x8] sm:$0xff]
        %v284 = vld [vmem:[%s2 + $0x10] sm:$0xff]
        %v285 = vld [vmem:[%s2 + $0x18] sm:$0xff]
        %v286 = vld [vmem:[%s2 + $0x20] sm:$0xff]
        %v287 = vld [vmem:[%s2 + $0x28] sm:$0xff]
        %v288 = vld [vmem:[%s2 + $0x30] sm:$0xff]
        %v289 = vld [vmem:[%s2 + $0x38] sm:$0xff]
        %v290 = vld [vmem:[%s2 + $0x40] sm:$0xff]
        %v291 = vld [vmem:[%s2 + $0x48] sm:$0xff]
        %v292 = vld [vmem:[%s2 + $0x50] sm:$0xff]
        %v293 = vld [vmem:[%s2 + $0x58] sm:$0xff]
        %v294 = vld [vmem:[%s2 + $0x60] sm:$0xff]
        %v295 = vld [vmem:[%s2 + $0x68] sm:$0xff]
        %v296 = vld [vmem:[%s2 + $0x70] sm:$0xff]
        %v297 = vld [vmem:[%s2 + $0x78] sm:$0xff]
        %v298 = vld [vmem:[%s2 + $0x80] sm:$0xff]
        %v299 = vld [vmem:[%s2 + $0x88] sm:$0xff]
        %v300 = vld [vmem:[%s2 + $0x90] sm:$0xff]
        %v301 = vld [vmem:[%s2 + $0x98] sm:$0xff]
        %v302 = vld [vmem:[%s2 + $0xa0] sm:$0xff]
        %v303 = vld [vmem:[%s2 + $0xa8] sm:$0xff]
        %v304 = vld [vmem:[%s2 + $0xb0] sm:$0xff]
        %v305 = vld [vmem:[%s2 + $0xb8] sm:$0xff]
        %v306 = vld [vmem:[%s2 + $0xc0] sm:$0xff]
        %v307 = vld [vmem:[%s2 + $0xc8] sm:$0xff]
        %v308 = vld [vmem:[%s2 + $0xd0] sm:$0xff]
        %v309 = vld [vmem:[%s2 + $0xd8] sm:$0xff]
        %v310 = vld [vmem:[%s2 + $0xe0] sm:$0xff]
        %v311 = vld [vmem:[%s2 + $0xe8] sm:$0xff]
        %v312 = vld [vmem:[%s2 + $0xf0] sm:$0xff]
        %v313 = vld [vmem:[%s2 + $0xf8] sm:$0xff]
        %v314 = vld [vmem:[%s2 + $0x100] sm:$0xff]
        %v315 = vld [vmem:[%s2 + $0x108] sm:$0xff]
        %v316 = vld [vmem:[%s2 + $0x110] sm:$0xff]
        %v317 = vld [vmem:[%s2 + $0x118] sm:$0xff]
        %v318 = vld [vmem:[%s2 + $0x120] sm:$0xff]
        %v319 = vld [vmem:[%s2 + $0x128] sm:$0xff]
        %v320 = vld [vmem:[%s2 + $0x130] sm:$0xff]
        %v321 = vld [vmem:[%s2 + $0x138] sm:$0xff]
        %v322 = vld [vmem:[%s2 + $0x140] sm:$0xff]
        %v323 = vld [vmem:[%s2 + $0x148] sm:$0xff]
        %v324 = vld [vmem:[%s2 + $0x150] sm:$0xff]
        %v325 = vld [vmem:[%s2 + $0x158] sm:$0xff]
        %v326 = vld [vmem:[%s2 + $0x160] sm:$0xff]
        %v327 = vld [vmem:[%s2 + $0x168] sm:$0xff]
        %v328 = vld [vmem:[%s2 + $0x170] sm:$0xff]
        %v329 = vld [vmem:[%s2 + $0x178] sm:$0xff]
        %v330 = vld [vmem:[%s2 + $0x180] sm:$0xff]
        %v331 = vld [vmem:[%s2 + $0x188] sm:$0xff]
        %v332 = vld [vmem:[%s2 + $0x190] sm:$0xff]
        %v333 = vld [vmem:[%s2 + $0x198] sm:$0xff]
        %v334 = vld [vmem:[%s2 + $0x1a0] sm:$0xff]
        %v335 = vld [vmem:[%s2 + $0x1a8] sm:$0xff]
        %v336 = vld [vmem:[%s2 + $0x1b0] sm:$0xff]
        %v337 = vld [vmem:[%s2 + $0x1b8] sm:$0xff]
        %v338 = vld [vmem:[%s2 + $0x1c0] sm:$0xff]
        %v339 = vld [vmem:[%s2 + $0x1c8] sm:$0xff]
        %v340 = vld [vmem:[%s2 + $0x1d0] sm:$0xff]
        %v341 = vld [vmem:[%s2 + $0x1d8] sm:$0xff]
        %v342 = vld [vmem:[%s2 + $0x1e0] sm:$0xff]
        %v343 = vld [vmem:[%s2 + $0x1e8] sm:$0xff]
        %v344 = vld [vmem:[%s2 + $0x1f0] sm:$0xff]
        %v345 = vld [vmem:[%s2 + $0x1f8] sm:$0xff]
        %v346 = vld [vmem:[%s2 + $0x200] sm:$0xff]
        %v347 = vld [vmem:[%s2 + $0x208] sm:$0xff]
        %v348 = vld [vmem:[%s2 + $0x210] sm:$0xff]
        %v349 = vld [vmem:[%s2 + $0x218] sm:$0xff]
        %v350 = vld [vmem:[%s2 + $0x220] sm:$0xff]
        %v351 = vld [vmem:[%s2 + $0x228] sm:$0xff]
        %v352 = vld [vmem:[%s2 + $0x230] sm:$0xff]
        %v353 = vld [vmem:[%s2 + $0x238] sm:$0xff]
        %v354 = vld [vmem:[%s2 + $0x240] sm:$0xff]
        %v355 = vld [vmem:[%s2 + $0x248] sm:$0xff]
        %v356 = vld [vmem:[%s2 + $0x250] sm:$0xff]
        %v357 = vld [vmem:[%s2 + $0x258] sm:$0xff]
        %v358 = vld [vmem:[%s2 + $0x260] sm:$0xff]
        %v359 = vld [vmem:[%s2 + $0x268] sm:$0xff]
        %v360 = vld [vmem:[%s2 + $0x270] sm:$0xff]
        %v361 = vld [vmem:[%s2 + $0x278] sm:$0xff]
        %362 = vmatprep.subr.mxu0 %v283
        %363 = vmatpush1.msra.mxu0 %v282
        %364 = vmatprep.subr.mxu0 %v288
        %365 = vmatpush1.msra.mxu0 %v287
        %366 = vmatprep.subr.mxu0 %v293
        %367 = vmatpush1.msra.mxu0 %v292
        %368 = vmatprep.subr.mxu0 %v298
        %369 = vmatpush1.msra.mxu0 %v297
        %370 = vmatprep.subr.mxu0 %v303
        %371 = vmatpush1.msra.mxu0 %v302
        %372 = vmatprep.subr.mxu0 %v308
        %373 = vmatpush1.msra.mxu0 %v307
        %374 = vmatprep.subr.mxu0 %v313
        %375 = vmatpush1.msra.mxu0 %v312
        %376 = vmatprep.subr.mxu0 %v318
        %377 = vmatpush1.msra.mxu0 %v317
        %378 = vmatprep.subr.mxu0 %v323
        %379 = vmatpush1.msra.mxu0 %v322
        %380 = vmatprep.subr.mxu0 %v328
        %381 = vmatpush1.msra.mxu0 %v327
        %382 = vmatprep.subr.mxu0 %v333
        %383 = vmatpush1.msra.mxu0 %v332
        %384 = vmatprep.subr.mxu0 %v338
        %385 = vmatpush1.msra.mxu0 %v337
        %386 = vmatprep.subr.mxu0 %v343
        %387 = vmatpush1.msra.mxu0 %v342
        %388 = vmatprep.subr.mxu0 %v348
        %389 = vmatpush1.msra.mxu0 %v347
        %390 = vmatprep.subr.mxu0 %v353
        %391 = vmatpush1.msra.mxu0 %v352
        %392 = vmatprep.subr.mxu0 %v358
        %393 = vmatpush1.msra.mxu0 %v357
        %394 = vmatprep.subr.mxu0 0.0
        %395 = vmatpush1.msra.mxu0 0.0
        %396 = vmatprep.subr.mxu0 0.0
        %397 = vmatpush1.msra.mxu0 0.0
        %398 = vmatprep.subr.mxu0 0.0
        %399 = vmatpush1.msra.mxu0 0.0
        %400 = vmatprep.subr.mxu0 0.0
        %401 = vmatpush1.msra.mxu0 0.0
        %402 = vmatprep.subr.mxu0 0.0
        %403 = vmatpush1.msra.mxu0 0.0
        %404 = vmatprep.subr.mxu0 0.0
        %405 = vmatpush1.msra.mxu0 0.0
        %406 = vmatprep.subr.mxu0 0.0
        %407 = vmatpush1.msra.mxu0 0.0
        %408 = vmatprep.subr.mxu0 0.0
        %409 = vmatpush1.msra.mxu0 0.0
        %410 = vmatprep.subr.mxu0 0.0
        %411 = vmatpush1.msra.mxu0 0.0
        %412 = vmatprep.subr.mxu0 0.0
        %413 = vmatpush1.msra.mxu0 0.0
        %414 = vmatprep.subr.mxu0 0.0
        %415 = vmatpush1.msra.mxu0 0.0
        %416 = vmatprep.subr.mxu0 0.0
        %417 = vmatpush1.msra.mxu0 0.0
        %418 = vmatprep.subr.mxu0 0.0
        %419 = vmatpush1.msra.mxu0 0.0
        %420 = vmatprep.subr.mxu0 0.0
        %421 = vmatpush1.msra.mxu0 0.0
        %422 = vmatprep.subr.mxu0 0.0
        %423 = vmatpush1.msra.mxu0 0.0
        %424 = vmatprep.subr.mxu0 0.0
        %425 = vmatpush1.msra.mxu0 0.0
        %426 = vmatprep.mubr.f32.mxu0 0.0
        %427 = vmatmul.mubr.f32.gmra.mrb[0].mxu0 %v265
        %v428 = vpop.f32.mrb[0].mxu0
        %v429 = vadd.f32 0.0, %v428
        %v430 = vpop.f32.mrb[0].mxu0
        %v431 = vadd.f32 0.0, %v430
        %432 = vdwg.mxu0
        %433 = vmatprep.subr.mxu0 %v285
        %434 = vmatpush1.msra.mxu0 %v284
        %435 = vmatprep.subr.mxu0 %v290
        %436 = vmatpush1.msra.mxu0 %v289
        %437 = vmatprep.subr.mxu0 %v295
        %438 = vmatpush1.msra.mxu0 %v294
        %439 = vmatprep.subr.mxu0 %v300
        %440 = vmatpush1.msra.mxu0 %v299
        %441 = vmatprep.subr.mxu0 %v305
        %442 = vmatpush1.msra.mxu0 %v304
        %443 = vmatprep.subr.mxu0 %v310
        %444 = vmatpush1.msra.mxu0 %v309
        %445 = vmatprep.subr.mxu0 %v315
        %446 = vmatpush1.msra.mxu0 %v314
        %447 = vmatprep.subr.mxu0 %v320
        %448 = vmatpush1.msra.mxu0 %v319
        %449 = vmatprep.subr.mxu0 %v325
        %450 = vmatpush1.msra.mxu0 %v324
        %451 = vmatprep.subr.mxu0 %v330
        %452 = vmatpush1.msra.mxu0 %v329
        %453 = vmatprep.subr.mxu0 %v335
        %454 = vmatpush1.msra.mxu0 %v334
        %455 = vmatprep.subr.mxu0 %v340
        %456 = vmatpush1.msra.mxu0 %v339
        %457 = vmatprep.subr.mxu0 %v345
        %458 = vmatpush1.msra.mxu0 %v344
        %459 = vmatprep.subr.mxu0 %v350
        %460 = vmatpush1.msra.mxu0 %v349
        %461 = vmatprep.subr.mxu0 %v355
        %462 = vmatpush1.msra.mxu0 %v354
        %463 = vmatprep.subr.mxu0 %v360
        %464 = vmatpush1.msra.mxu0 %v359
        %465 = vmatprep.subr.mxu0 0.0
        %466 = vmatpush1.msra.mxu0 0.0
        %467 = vmatprep.subr.mxu0 0.0
        %468 = vmatpush1.msra.mxu0 0.0
        %469 = vmatprep.subr.mxu0 0.0
        %470 = vmatpush1.msra.mxu0 0.0
        %471 = vmatprep.subr.mxu0 0.0
        %472 = vmatpush1.msra.mxu0 0.0
        %473 = vmatprep.subr.mxu0 0.0
        %474 = vmatpush1.msra.mxu0 0.0
        %475 = vmatprep.subr.mxu0 0.0
        %476 = vmatpush1.msra.mxu0 0.0
        %477 = vmatprep.subr.mxu0 0.0
        %478 = vmatpush1.msra.mxu0 0.0
        %479 = vmatprep.subr.mxu0 0.0
        %480 = vmatpush1.msra.mxu0 0.0
        %481 = vmatprep.subr.mxu0 0.0
        %482 = vmatpush1.msra.mxu0 0.0
        %483 = vmatprep.subr.mxu0 0.0
        %484 = vmatpush1.msra.mxu0 0.0
        %485 = vmatprep.subr.mxu0 0.0
        %486 = vmatpush1.msra.mxu0 0.0
        %487 = vmatprep.subr.mxu0 0.0
        %488 = vmatpush1.msra.mxu0 0.0
        %489 = vmatprep.subr.mxu0 0.0
        %490 = vmatpush1.msra.mxu0 0.0
        %491 = vmatprep.subr.mxu0 0.0
        %492 = vmatpush1.msra.mxu0 0.0
        %493 = vmatprep.subr.mxu0 0.0
        %494 = vmatpush1.msra.mxu0 0.0
        %495 = vmatprep.subr.mxu0 0.0
        %496 = vmatpush1.msra.mxu0 0.0
        %497 = vmatprep.mubr.f32.mxu0 0.0
        %498 = vmatmul.mubr.f32.gmra.mrb[0].mxu0 %v265
        %v499 = vpop.f32.mrb[0].mxu0
        %v500 = vadd.f32 0.0, %v499
        %v501 = vpop.f32.mrb[0].mxu0
        %v502 = vadd.f32 0.0, %v501
        %503 = vdwg.mxu0
        %504 = vmatprep.subr.mxu0 0.0
        %505 = vmatpush1.msra.mxu0 %v286
        %506 = vmatprep.subr.mxu0 0.0
        %507 = vmatpush1.msra.mxu0 %v291
        %508 = vmatprep.subr.mxu0 0.0
        %509 = vmatpush1.msra.mxu0 %v296
        %510 = vmatprep.subr.mxu0 0.0
        %511 = vmatpush1.msra.mxu0 %v301
        %512 = vmatprep.subr.mxu0 0.0
        %513 = vmatpush1.msra.mxu0 %v306
        %514 = vmatprep.subr.mxu0 0.0
        %515 = vmatpush1.msra.mxu0 %v311
        %516 = vmatprep.subr.mxu0 0.0
        %517 = vmatpush1.msra.mxu0 %v316
        %518 = vmatprep.subr.mxu0 0.0
        %519 = vmatpush1.msra.mxu0 %v321
        %520 = vmatprep.subr.mxu0 0.0
        %521 = vmatpush1.msra.mxu0 %v326
        %522 = vmatprep.subr.mxu0 0.0
        %523 = vmatpush1.msra.mxu0 %v331
        %524 = vmatprep.subr.mxu0 0.0
        %525 = vmatpush1.msra.mxu0 %v336
        %526 = vmatprep.subr.mxu0 0.0
        %527 = vmatpush1.msra.mxu0 %v341
        %528 = vmatprep.subr.mxu0 0.0
        %529 = vmatpush1.msra.mxu0 %v346
        %530 = vmatprep.subr.mxu0 0.0
        %531 = vmatpush1.msra.mxu0 %v351
        %532 = vmatprep.subr.mxu0 0.0
        %533 = vmatpush1.msra.mxu0 %v356
        %534 = vmatprep.subr.mxu0 0.0
        %535 = vmatpush1.msra.mxu0 %v361
        %536 = vmatprep.subr.mxu0 0.0
        %537 = vmatpush1.msra.mxu0 0.0
        %538 = vmatprep.subr.mxu0 0.0
        %539 = vmatpush1.msra.mxu0 0.0
        %540 = vmatprep.subr.mxu0 0.0
        %541 = vmatpush1.msra.mxu0 0.0
        %542 = vmatprep.subr.mxu0 0.0
        %543 = vmatpush1.msra.mxu0 0.0
        %544 = vmatprep.subr.mxu0 0.0
        %545 = vmatpush1.msra.mxu0 0.0
        %546 = vmatprep.subr.mxu0 0.0
        %547 = vmatpush1.msra.mxu0 0.0
        %548 = vmatprep.subr.mxu0 0.0
        %549 = vmatpush1.msra.mxu0 0.0
        %550 = vmatprep.subr.mxu0 0.0
        %551 = vmatpush1.msra.mxu0 0.0
        %552 = vmatprep.subr.mxu0 0.0
        %553 = vmatpush1.msra.mxu0 0.0
        %554 = vmatprep.subr.mxu0 0.0
        %555 = vmatpush1.msra.mxu0 0.0
        %556 = vmatprep.subr.mxu0 0.0
        %557 = vmatpush1.msra.mxu0 0.0
        %558 = vmatprep.subr.mxu0 0.0
        %559 = vmatpush1.msra.mxu0 0.0
        %560 = vmatprep.subr.mxu0 0.0
        %561 = vmatpush1.msra.mxu0 0.0
        %562 = vmatprep.subr.mxu0 0.0
        %563 = vmatpush1.msra.mxu0 0.0
        %564 = vmatprep.subr.mxu0 0.0
        %565 = vmatpush1.msra.mxu0 0.0
        %566 = vmatprep.subr.mxu0 0.0
        %567 = vmatpush1.msra.mxu0 0.0
        %568 = vmatprep.mubr.f32.mxu0 0.0
        %569 = vmatmul.mubr.f32.gmra.mrb[0].mxu0 %v265
        %v570 = vpop.f32.mrb[0].mxu0
        %v571 = vadd.f32 0.0, %v570
        %v572 = vpop.f32.mrb[0].mxu0
        %573 = vdwg.mxu0
        %v574 = vld [vmem:[%s3] sm:$0xf]
        %v575 = vld [vmem:[%s4] sm:$0xf]
        %577 = vset.pattern.permute.xlu0 0
        %578 = vperm.xlu0 %577, %v575
        %v579 = vpop.permute.xlu0 %578
        %581 = vmatprep.subr.mxu0 0.0
        %582 = vmatpush1.xpose.msra.mxu0 %v266
        %583 = vmatprep.subr.mxu0 0.0
        %584 = vmatpush1.xpose.msra.mxu0 %v267
        %585 = vmatprep.subr.mxu0 0.0
        %586 = vmatpush1.xpose.msra.mxu0 %v268
        %587 = vmatprep.subr.mxu0 0.0
        %588 = vmatpush1.xpose.msra.mxu0 %v269
        %589 = vmatprep.subr.mxu0 0.0
        %590 = vmatpush1.xpose.msra.mxu0 %v270
        %591 = vmatprep.subr.mxu0 0.0
        %592 = vmatpush1.xpose.msra.mxu0 %v271
        %593 = vmatprep.subr.mxu0 0.0
        %594 = vmatpush1.xpose.msra.mxu0 %v272
        %595 = vmatprep.subr.mxu0 0.0
        %596 = vmatpush1.xpose.msra.mxu0 %v273
        %597 = vmatprep.subr.mxu0 0.0
        %598 = vmatpush1.xpose.msra.mxu0 %v274
        %599 = vmatprep.subr.mxu0 0.0
        %600 = vmatpush1.xpose.msra.mxu0 %v275
        %601 = vmatprep.subr.mxu0 0.0
        %602 = vmatpush1.xpose.msra.mxu0 %v276
        %603 = vmatprep.subr.mxu0 0.0
        %604 = vmatpush1.xpose.msra.mxu0 %v277
        %605 = vmatprep.subr.mxu0 0.0
        %606 = vmatpush1.xpose.msra.mxu0 %v278
        %607 = vmatprep.subr.mxu0 0.0
        %608 = vmatpush1.xpose.msra.mxu0 %v279
        %609 = vmatprep.subr.mxu0 0.0
        %610 = vmatpush1.xpose.msra.mxu0 %v280
        %611 = vmatprep.subr.mxu0 0.0
        %612 = vmatpush1.xpose.msra.mxu0 %v281
        %613 = vmatprep.subr.mxu0 0.0
        %614 = vmatpush1.xpose.msra.mxu0 0.0
        %615 = vmatprep.subr.mxu0 0.0
        %616 = vmatpush1.xpose.msra.mxu0 0.0
        %617 = vmatprep.subr.mxu0 0.0
        %618 = vmatpush1.xpose.msra.mxu0 0.0
        %619 = vmatprep.subr.mxu0 0.0
        %620 = vmatpush1.xpose.msra.mxu0 0.0
        %621 = vmatprep.subr.mxu0 0.0
        %622 = vmatpush1.xpose.msra.mxu0 0.0
        %623 = vmatprep.subr.mxu0 0.0
        %624 = vmatpush1.xpose.msra.mxu0 0.0
        %625 = vmatprep.subr.mxu0 0.0
        %626 = vmatpush1.xpose.msra.mxu0 0.0
        %627 = vmatprep.subr.mxu0 0.0
        %628 = vmatpush1.xpose.msra.mxu0 0.0
        %629 = vmatprep.subr.mxu0 0.0
        %630 = vmatpush1.xpose.msra.mxu0 0.0
        %631 = vmatprep.subr.mxu0 0.0
        %632 = vmatpush1.xpose.msra.mxu0 0.0
        %633 = vmatprep.subr.mxu0 0.0
        %634 = vmatpush1.xpose.msra.mxu0 0.0
        %635 = vmatprep.subr.mxu0 0.0
        %636 = vmatpush1.xpose.msra.mxu0 0.0
        %637 = vmatprep.subr.mxu0 0.0
        %638 = vmatpush1.xpose.msra.mxu0 0.0
        %639 = vmatprep.subr.mxu0 0.0
        %640 = vmatpush1.xpose.msra.mxu0 0.0
        %641 = vmatprep.subr.mxu0 0.0
        %642 = vmatpush1.xpose.msra.mxu0 0.0
        %643 = vmatprep.subr.mxu0 0.0
        %644 = vmatpush1.xpose.msra.mxu0 0.0
        %645 = vmatprep.mubr.f32.mxu0 0.0
        %646 = vmatmul.mubr.f32.gmra.mrb[0].mxu0 %v574
        %v647 = vpop.f32.mrb[0].mxu0
        %v648 = vadd.f32 %v579, %v647
        %v649 = vpop.f32.mrb[0].mxu0
        %650 = vdwg.mxu0
        %652 = vset.pattern.permute.xlu0 0
        %653 = vperm.xlu0 %652, %v571
        %v654 = vpop.permute.xlu0 %653
        %656 = vmatprep.subr.mxu0 0.0
        %657 = vmatpush1.xpose.msra.mxu0 %v266
        %658 = vmatprep.subr.mxu0 0.0
        %659 = vmatpush1.xpose.msra.mxu0 %v267
        %660 = vmatprep.subr.mxu0 0.0
        %661 = vmatpush1.xpose.msra.mxu0 %v268
        %662 = vmatprep.subr.mxu0 0.0
        %663 = vmatpush1.xpose.msra.mxu0 %v269
        %664 = vmatprep.subr.mxu0 0.0
        %665 = vmatpush1.xpose.msra.mxu0 %v270
        %666 = vmatprep.subr.mxu0 0.0
        %667 = vmatpush1.xpose.msra.mxu0 %v271
        %668 = vmatprep.subr.mxu0 0.0
        %669 = vmatpush1.xpose.msra.mxu0 %v272
        %670 = vmatprep.subr.mxu0 0.0
        %671 = vmatpush1.xpose.msra.mxu0 %v273
        %672 = vmatprep.subr.mxu0 0.0
        %673 = vmatpush1.xpose.msra.mxu0 %v274
        %674 = vmatprep.subr.mxu0 0.0
        %675 = vmatpush1.xpose.msra.mxu0 %v275
        %676 = vmatprep.subr.mxu0 0.0
        %677 = vmatpush1.xpose.msra.mxu0 %v276
        %678 = vmatprep.subr.mxu0 0.0
        %679 = vmatpush1.xpose.msra.mxu0 %v277
        %680 = vmatprep.subr.mxu0 0.0
        %681 = vmatpush1.xpose.msra.mxu0 %v278
        %682 = vmatprep.subr.mxu0 0.0
        %683 = vmatpush1.xpose.msra.mxu0 %v279
        %684 = vmatprep.subr.mxu0 0.0
        %685 = vmatpush1.xpose.msra.mxu0 %v280
        %686 = vmatprep.subr.mxu0 0.0
        %687 = vmatpush1.xpose.msra.mxu0 %v281
        %688 = vmatprep.subr.mxu0 0.0
        %689 = vmatpush1.xpose.msra.mxu0 0.0
        %690 = vmatprep.subr.mxu0 0.0
        %691 = vmatpush1.xpose.msra.mxu0 0.0
        %692 = vmatprep.subr.mxu0 0.0
        %693 = vmatpush1.xpose.msra.mxu0 0.0
        %694 = vmatprep.subr.mxu0 0.0
        %695 = vmatpush1.xpose.msra.mxu0 0.0
        %696 = vmatprep.subr.mxu0 0.0
        %697 = vmatpush1.xpose.msra.mxu0 0.0
        %698 = vmatprep.subr.mxu0 0.0
        %699 = vmatpush1.xpose.msra.mxu0 0.0
        %700 = vmatprep.subr.mxu0 0.0
        %701 = vmatpush1.xpose.msra.mxu0 0.0
        %702 = vmatprep.subr.mxu0 0.0
        %703 = vmatpush1.xpose.msra.mxu0 0.0
        %704 = vmatprep.subr.mxu0 0.0
        %705 = vmatpush1.xpose.msra.mxu0 0.0
        %706 = vmatprep.subr.mxu0 0.0
        %707 = vmatpush1.xpose.msra.mxu0 0.0
        %708 = vmatprep.subr.mxu0 0.0
        %709 = vmatpush1.xpose.msra.mxu0 0.0
        %710 = vmatprep.subr.mxu0 0.0
        %711 = vmatpush1.xpose.msra.mxu0 0.0
        %712 = vmatprep.subr.mxu0 0.0
        %713 = vmatpush1.xpose.msra.mxu0 0.0
        %714 = vmatprep.subr.mxu0 0.0
        %715 = vmatpush1.xpose.msra.mxu0 0.0
        %716 = vmatprep.subr.mxu0 0.0
        %717 = vmatpush1.xpose.msra.mxu0 0.0
        %718 = vmatprep.subr.mxu0 0.0
        %719 = vmatpush1.xpose.msra.mxu0 0.0
        %720 = vmatprep.mubr.f32.mxu0 0.0
        %721 = vmatmul.mubr.f32.gmra.mrb[0].mxu0 %v429
        %v722 = vpop.f32.mrb[0].mxu0
        %v723 = vadd.f32 %v654, %v722
        %v724 = vpop.f32.mrb[0].mxu0
        %725 = vdwg.mxu0
        %v726 = vlaneseq
        %v727 = vshrl.u32 %v726, 7
        %v728 = vsub.s32 0, %v727
        %v729 = vrot.slane %v648, %v728
        %v730 = vadd.f32 %v723, %v729
        %731 = vst [vmem:[%s252] sm:$0xff] %v730
        %732 = vset.pattern.permute.xlu0 1
        %733 = vperm.xlu0 %732, %v571
        %v734 = vpop.permute.xlu0 %733
        %736 = vmatprep.subr.mxu0 0.0
        %737 = vmatpush1.xpose.msra.mxu0 %v266
        %738 = vmatprep.subr.mxu0 0.0
        %739 = vmatpush1.xpose.msra.mxu0 %v267
        %740 = vmatprep.subr.mxu0 0.0
        %741 = vmatpush1.xpose.msra.mxu0 %v268
        %742 = vmatprep.subr.mxu0 0.0
        %743 = vmatpush1.xpose.msra.mxu0 %v269
        %744 = vmatprep.subr.mxu0 0.0
        %745 = vmatpush1.xpose.msra.mxu0 %v270
        %746 = vmatprep.subr.mxu0 0.0
        %747 = vmatpush1.xpose.msra.mxu0 %v271
        %748 = vmatprep.subr.mxu0 0.0
        %749 = vmatpush1.xpose.msra.mxu0 %v272
        %750 = vmatprep.subr.mxu0 0.0
        %751 = vmatpush1.xpose.msra.mxu0 %v273
        %752 = vmatprep.subr.mxu0 0.0
        %753 = vmatpush1.xpose.msra.mxu0 %v274
        %754 = vmatprep.subr.mxu0 0.0
        %755 = vmatpush1.xpose.msra.mxu0 %v275
        %756 = vmatprep.subr.mxu0 0.0
        %757 = vmatpush1.xpose.msra.mxu0 %v276
        %758 = vmatprep.subr.mxu0 0.0
        %759 = vmatpush1.xpose.msra.mxu0 %v277
        %760 = vmatprep.subr.mxu0 0.0
        %761 = vmatpush1.xpose.msra.mxu0 %v278
        %762 = vmatprep.subr.mxu0 0.0
        %763 = vmatpush1.xpose.msra.mxu0 %v279
        %764 = vmatprep.subr.mxu0 0.0
        %765 = vmatpush1.xpose.msra.mxu0 %v280
        %766 = vmatprep.subr.mxu0 0.0
        %767 = vmatpush1.xpose.msra.mxu0 %v281
        %768 = vmatprep.subr.mxu0 0.0
        %769 = vmatpush1.xpose.msra.mxu0 0.0
        %770 = vmatprep.subr.mxu0 0.0
        %771 = vmatpush1.xpose.msra.mxu0 0.0
        %772 = vmatprep.subr.mxu0 0.0
        %773 = vmatpush1.xpose.msra.mxu0 0.0
        %774 = vmatprep.subr.mxu0 0.0
        %775 = vmatpush1.xpose.msra.mxu0 0.0
        %776 = vmatprep.subr.mxu0 0.0
        %777 = vmatpush1.xpose.msra.mxu0 0.0
        %778 = vmatprep.subr.mxu0 0.0
        %779 = vmatpush1.xpose.msra.mxu0 0.0
        %780 = vmatprep.subr.mxu0 0.0
        %781 = vmatpush1.xpose.msra.mxu0 0.0
        %782 = vmatprep.subr.mxu0 0.0
        %783 = vmatpush1.xpose.msra.mxu0 0.0
        %784 = vmatprep.subr.mxu0 0.0
        %785 = vmatpush1.xpose.msra.mxu0 0.0
        %786 = vmatprep.subr.mxu0 0.0
        %787 = vmatpush1.xpose.msra.mxu0 0.0
        %788 = vmatprep.subr.mxu0 0.0
        %789 = vmatpush1.xpose.msra.mxu0 0.0
        %790 = vmatprep.subr.mxu0 0.0
        %791 = vmatpush1.xpose.msra.mxu0 0.0
        %792 = vmatprep.subr.mxu0 0.0
        %793 = vmatpush1.xpose.msra.mxu0 0.0
        %794 = vmatprep.subr.mxu0 0.0
        %795 = vmatpush1.xpose.msra.mxu0 0.0
        %796 = vmatprep.subr.mxu0 0.0
        %797 = vmatpush1.xpose.msra.mxu0 0.0
        %798 = vmatprep.subr.mxu0 0.0
        %799 = vmatpush1.xpose.msra.mxu0 0.0
        %800 = vmatprep.mubr.f32.mxu0 0.0
        %801 = vmatmul.mubr.f32.gmra.mrb[0].mxu0 %v431
        %v802 = vpop.f32.mrb[0].mxu0
        %v803 = vadd.f32 %v734, %v802
        %v804 = vpop.f32.mrb[0].mxu0
        %805 = vdwg.mxu0
        %v806 = vlaneseq
        %v807 = vshrl.u32 %v806, 7
        %v808 = vsub.s32 1, %v807
        %v809 = vrot.slane %v648, %v808
        %v810 = vadd.f32 %v803, %v809
        %811 = vst [vmem:[%s252 + $0x8] sm:$0xff] %v810
        %812 = vset.pattern.permute.xlu0 2
        %813 = vperm.xlu0 %812, %v571
        %v814 = vpop.permute.xlu0 %813
        %816 = vmatprep.subr.mxu0 0.0
        %817 = vmatpush1.xpose.msra.mxu0 %v266
        %818 = vmatprep.subr.mxu0 0.0
        %819 = vmatpush1.xpose.msra.mxu0 %v267
        %820 = vmatprep.subr.mxu0 0.0
        %821 = vmatpush1.xpose.msra.mxu0 %v268
        %822 = vmatprep.subr.mxu0 0.0
        %823 = vmatpush1.xpose.msra.mxu0 %v269
        %824 = vmatprep.subr.mxu0 0.0
        %825 = vmatpush1.xpose.msra.mxu0 %v270
        %826 = vmatprep.subr.mxu0 0.0
        %827 = vmatpush1.xpose.msra.mxu0 %v271
        %828 = vmatprep.subr.mxu0 0.0
        %829 = vmatpush1.xpose.msra.mxu0 %v272
        %830 = vmatprep.subr.mxu0 0.0
        %831 = vmatpush1.xpose.msra.mxu0 %v273
        %832 = vmatprep.subr.mxu0 0.0
        %833 = vmatpush1.xpose.msra.mxu0 %v274
        %834 = vmatprep.subr.mxu0 0.0
        %835 = vmatpush1.xpose.msra.mxu0 %v275
        %836 = vmatprep.subr.mxu0 0.0
        %837 = vmatpush1.xpose.msra.mxu0 %v276
        %838 = vmatprep.subr.mxu0 0.0
        %839 = vmatpush1.xpose.msra.mxu0 %v277
        %840 = vmatprep.subr.mxu0 0.0
        %841 = vmatpush1.xpose.msra.mxu0 %v278
        %842 = vmatprep.subr.mxu0 0.0
        %843 = vmatpush1.xpose.msra.mxu0 %v279
        %844 = vmatprep.subr.mxu0 0.0
        %845 = vmatpush1.xpose.msra.mxu0 %v280
        %846 = vmatprep.subr.mxu0 0.0
        %847 = vmatpush1.xpose.msra.mxu0 %v281
        %848 = vmatprep.subr.mxu0 0.0
        %849 = vmatpush1.xpose.msra.mxu0 0.0
        %850 = vmatprep.subr.mxu0 0.0
        %851 = vmatpush1.xpose.msra.mxu0 0.0
        %852 = vmatprep.subr.mxu0 0.0
        %853 = vmatpush1.xpose.msra.mxu0 0.0
        %854 = vmatprep.subr.mxu0 0.0
        %855 = vmatpush1.xpose.msra.mxu0 0.0
        %856 = vmatprep.subr.mxu0 0.0
        %857 = vmatpush1.xpose.msra.mxu0 0.0
        %858 = vmatprep.subr.mxu0 0.0
        %859 = vmatpush1.xpose.msra.mxu0 0.0
        %860 = vmatprep.subr.mxu0 0.0
        %861 = vmatpush1.xpose.msra.mxu0 0.0
        %862 = vmatprep.subr.mxu0 0.0
        %863 = vmatpush1.xpose.msra.mxu0 0.0
        %864 = vmatprep.subr.mxu0 0.0
        %865 = vmatpush1.xpose.msra.mxu0 0.0
        %866 = vmatprep.subr.mxu0 0.0
        %867 = vmatpush1.xpose.msra.mxu0 0.0
        %868 = vmatprep.subr.mxu0 0.0
        %869 = vmatpush1.xpose.msra.mxu0 0.0
        %870 = vmatprep.subr.mxu0 0.0
        %871 = vmatpush1.xpose.msra.mxu0 0.0
        %872 = vmatprep.subr.mxu0 0.0
        %873 = vmatpush1.xpose.msra.mxu0 0.0
        %874 = vmatprep.subr.mxu0 0.0
        %875 = vmatpush1.xpose.msra.mxu0 0.0
        %876 = vmatprep.subr.mxu0 0.0
        %877 = vmatpush1.xpose.msra.mxu0 0.0
        %878 = vmatprep.subr.mxu0 0.0
        %879 = vmatpush1.xpose.msra.mxu0 0.0
        %880 = vmatprep.mubr.f32.mxu0 0.0
        %881 = vmatmul.mubr.f32.gmra.mrb[0].mxu0 %v500
        %v882 = vpop.f32.mrb[0].mxu0
        %v883 = vadd.f32 %v814, %v882
        %v884 = vpop.f32.mrb[0].mxu0
        %885 = vdwg.mxu0
        %v886 = vlaneseq
        %v887 = vshrl.u32 %v886, 7
        %v888 = vsub.s32 2, %v887
        %v889 = vrot.slane %v648, %v888
        %v890 = vadd.f32 %v883, %v889
        %891 = vst [vmem:[%s252 + $0x10] sm:$0xff] %v890
        %892 = vset.pattern.permute.xlu0 3
        %893 = vperm.xlu0 %892, %v571
        %v894 = vpop.permute.xlu0 %893
        %896 = vmatprep.subr.mxu0 0.0
        %897 = vmatpush1.xpose.msra.mxu0 %v266
        %898 = vmatprep.subr.mxu0 0.0
        %899 = vmatpush1.xpose.msra.mxu0 %v267
        %900 = vmatprep.subr.mxu0 0.0
        %901 = vmatpush1.xpose.msra.mxu0 %v268
        %902 = vmatprep.subr.mxu0 0.0
        %903 = vmatpush1.xpose.msra.mxu0 %v269
        %904 = vmatprep.subr.mxu0 0.0
        %905 = vmatpush1.xpose.msra.mxu0 %v270
        %906 = vmatprep.subr.mxu0 0.0
        %907 = vmatpush1.xpose.msra.mxu0 %v271
        %908 = vmatprep.subr.mxu0 0.0
        %909 = vmatpush1.xpose.msra.mxu0 %v272
        %910 = vmatprep.subr.mxu0 0.0
        %911 = vmatpush1.xpose.msra.mxu0 %v273
        %912 = vmatprep.subr.mxu0 0.0
        %913 = vmatpush1.xpose.msra.mxu0 %v274
        %914 = vmatprep.subr.mxu0 0.0
        %915 = vmatpush1.xpose.msra.mxu0 %v275
        %916 = vmatprep.subr.mxu0 0.0
        %917 = vmatpush1.xpose.msra.mxu0 %v276
        %918 = vmatprep.subr.mxu0 0.0
        %919 = vmatpush1.xpose.msra.mxu0 %v277
        %920 = vmatprep.subr.mxu0 0.0
        %921 = vmatpush1.xpose.msra.mxu0 %v278
        %922 = vmatprep.subr.mxu0 0.0
        %923 = vmatpush1.xpose.msra.mxu0 %v279
        %924 = vmatprep.subr.mxu0 0.0
        %925 = vmatpush1.xpose.msra.mxu0 %v280
        %926 = vmatprep.subr.mxu0 0.0
        %927 = vmatpush1.xpose.msra.mxu0 %v281
        %928 = vmatprep.subr.mxu0 0.0
        %929 = vmatpush1.xpose.msra.mxu0 0.0
        %930 = vmatprep.subr.mxu0 0.0
        %931 = vmatpush1.xpose.msra.mxu0 0.0
        %932 = vmatprep.subr.mxu0 0.0
        %933 = vmatpush1.xpose.msra.mxu0 0.0
        %934 = vmatprep.subr.mxu0 0.0
        %935 = vmatpush1.xpose.msra.mxu0 0.0
        %936 = vmatprep.subr.mxu0 0.0
        %937 = vmatpush1.xpose.msra.mxu0 0.0
        %938 = vmatprep.subr.mxu0 0.0
        %939 = vmatpush1.xpose.msra.mxu0 0.0
        %940 = vmatprep.subr.mxu0 0.0
        %941 = vmatpush1.xpose.msra.mxu0 0.0
        %942 = vmatprep.subr.mxu0 0.0
        %943 = vmatpush1.xpose.msra.mxu0 0.0
        %944 = vmatprep.subr.mxu0 0.0
        %945 = vmatpush1.xpose.msra.mxu0 0.0
        %946 = vmatprep.subr.mxu0 0.0
        %947 = vmatpush1.xpose.msra.mxu0 0.0
        %948 = vmatprep.subr.mxu0 0.0
        %949 = vmatpush1.xpose.msra.mxu0 0.0
        %950 = vmatprep.subr.mxu0 0.0
        %951 = vmatpush1.xpose.msra.mxu0 0.0
        %952 = vmatprep.subr.mxu0 0.0
        %953 = vmatpush1.xpose.msra.mxu0 0.0
        %954 = vmatprep.subr.mxu0 0.0
        %955 = vmatpush1.xpose.msra.mxu0 0.0
        %956 = vmatprep.subr.mxu0 0.0
        %957 = vmatpush1.xpose.msra.mxu0 0.0
        %958 = vmatprep.subr.mxu0 0.0
        %959 = vmatpush1.xpose.msra.mxu0 0.0
        %960 = vmatprep.mubr.f32.mxu0 0.0
        %961 = vmatmul.mubr.f32.gmra.mrb[0].mxu0 %v502
        %v962 = vpop.f32.mrb[0].mxu0
        %v963 = vadd.f32 %v894, %v962
        %v964 = vpop.f32.mrb[0].mxu0
        %965 = vdwg.mxu0
        %v966 = vlaneseq
        %v967 = vshrl.u32 %v966, 7
        %v968 = vsub.s32 3, %v967
        %v969 = vrot.slane %v648, %v968
        %v970 = vadd.f32 %v963, %v969
        %971 = vst [vmem:[%s252 + $0x18] sm:$0xff] %v970
        %s972 = sand.u32 %s158, 1
        %s973 = scalar_lea.sflag [#allocation3], %s972
        %s974 = sand.u32 %s158, 1
        %s975 = smul.addr %s974, 32
        %s976 = scalar_lea.vmem [#allocation2], %s975
        // Predicated region
        $region41: #{biaffine_attention.1} parent=39 // pred_check
          %p977 = pneg %p168
        $region42: #{biaffine_attention.1} parent=39 // pred_check_branch
          %979 = sbr.rel (%p977) target = $region44
        $region43: #{biaffine_attention.1} parent=39 // pred_region
          %s981 = ssub.s32 512, 512
          %982 = vsyncadd %s973, %s981
          %s983 = smul.addr %s24, 4
          %s984 = smul.addr %s23, 4
          %s985 = sadd.s32 %s983, %s984
          %s986 = smul.addr %s985, 128
          %s987 = scalar_lea.hbm %s5, %s986
          %s989 = sshll.u32 %s976, 4
          %s990 = int_to_ptr.vmem [resolvable:$true] %s989
          %992 = dma.vmem_to_hbm [thread:$0]  %s990, 512, %s987, %s973
        $region44: #{biaffine_attention.1} parent=39 // pred_fallthru
          _
      $region40: #{biaffine_attention.1} parent=5 // pred_fallthru
        _
      %p993 = scmp.le.s32.totalorder 2, %s14
      // Predicated region
      $region45: #{biaffine_attention.1} parent=5 // pred_check
        %p994 = pneg %p993
      $region46: #{biaffine_attention.1} parent=5 // pred_check_branch
        %996 = sbr.rel (%p994) target = $region48
      $region47: #{biaffine_attention.1} parent=5 // pred_region
        %s997 = ssub.s32 %s14, 2
        // Predicated region
        $region49: #{biaffine_attention.1} parent=47 // pred_check
          %p998 = pneg %p174
        $region50: #{biaffine_attention.1} parent=47 // pred_check_branch
          %1000 = sbr.rel (%p998) target = $region52
        $region51: #{biaffine_attention.1} parent=47 // pred_region
          %s1001 = sand.u32 %s159, 1
          %s1002 = scalar_lea.sflag [#allocation3], %s1001
          %s1003 = sand.u32 %s159, 1
          %s1004 = smul.addr %s1003, 32
          %s1005 = scalar_lea.vmem [#allocation2], %s1004
          %1006 = dma.done %s1002, 512
        $region52: #{biaffine_attention.1} parent=47 // pred_fallthru
          _
      $region48: #{biaffine_attention.1} parent=5 // pred_fallthru
        _
    $region6: #{biaffine_attention.1} parent=1 // loop_footer
      %s18 = sadd.s32 1, %s14
    $region7: #{biaffine_attention.1} parent=1 // loop_footer_branch
      %13 = sbr.rel target = $region3
    $region8: #{biaffine_attention.1} parent=1 // loop_exit
      _
    %1007 = vsyncpa [#allocation3], 1
    %s1008 = scalar_lea.sflag [#allocation3], 1
    %1009 = vsyncpa %s1008, 1

</llo_original>
